<compile_context>
chip_gen: v6e
topology: v6e:2x2x1
jax: 0.10.0
libtpu: 0.0.40
codegen_flags: <defaults>
</compile_context>

<pallas_src>
import jax
import jax.numpy as jnp
from jax.experimental import pallas as pl
from jax.experimental.pallas import tpu as pltpu


def _flatten_kernel(x_ref, o_ref):
    # x_ref: (TN, H, W) slab, o_ref: (TN, W*H) lane-dense output slab.
    tn, h, w = x_ref.shape
    o_ref[...] = jnp.transpose(x_ref[...], (0, 2, 1)).reshape(tn, w * h)


def flatten(x, *, max_block_bytes=8 * 1024 * 1024):
    """Equivalent of torch Flatten.forward.

    Args:
      x: float array [B, C, H, W]
    Returns:
      float array [B, C*H*W], flattened in (C, W, H) order, matching
      x.transpose(3, 2).contiguous().view(B, -1).
    """
    B, C, H, W = x.shape
    N = B * C
    itemsize = jnp.dtype(x.dtype).itemsize

    xs = x.reshape(N, H, W)

    # ---- pick TN (slabs per grid step) ------------------------------------
    slab_bytes = H * W * itemsize
    # Pipeline holds 2 input + 2 output buffers of TN slabs each.
    max_tn = max(1, max_block_bytes // (4 * slab_bytes))
    tn = min(N, max_tn)
    tn = max(8, (tn // 8) * 8)            # multiple of 8 sublanes, >= 8
    # Keep >= 2 grid steps when possible so v7x's two TensorCores both work.
    if tn >= N and N > 8:
        tn = max(8, (((N + 1) // 2 + 7) // 8) * 8)

    # Pad N up to a multiple of tn so every block is full-size.
    n_pad = pl.cdiv(N, tn) * tn
    if n_pad != N:
        xs = jnp.pad(xs, ((0, n_pad - N), (0, 0), (0, 0)))
    grid = (n_pad // tn,)

    out = pl.pallas_call(
        _flatten_kernel,
        out_shape=jax.ShapeDtypeStruct((n_pad, W * H), x.dtype),
        grid=grid,
        in_specs=[pl.BlockSpec((tn, H, W), lambda i: (i, 0, 0))],
        out_specs=pl.BlockSpec((tn, W * H), lambda i: (i, 0)),
        compiler_params=pltpu.CompilerParams(
            dimension_semantics=("parallel",),
        ),
        cost_estimate=pl.CostEstimate(
            flops=0,
            transcendentals=0,
            bytes_accessed=2 * N * H * W * itemsize,
        ),
    )(xs)

    # Drop padding rows; rows are in (b, c) order so this reshape matches
    # PyTorch's .view(B, -1) on the NCWH-contiguous tensor.
    return out[:N].reshape(B, C * W * H)


if __name__ == "__main__":
    key = jax.random.PRNGKey(0)
    B, C, H, W = 2, 4, 16, 16
    x = jax.random.normal(key, (B, C, H, W), dtype=jnp.float32)

    out = flatten(x)
    out = jax.block_until_ready(out)

    # Reference: jnp equivalent of torch transpose(3,2).contiguous().view(B,-1)
    ref = jnp.transpose(x, (0, 1, 3, 2)).reshape(B, -1)
    assert out.shape == (B, C * H * W), out.shape
    assert jnp.allclose(out, ref), "mismatch vs reference"

    print("KERNEL_OK")
</pallas_src>

<mosaic_0001>
module attributes {stable_mosaic.version = 11 : i64} {
  func.func @_flatten_kernel(%arg0: i32, %arg1: memref<8x16x16xf32, #tpu.memory_space<vmem>>, %arg2: memref<8x256xf32, #tpu.memory_space<vmem>>) attributes {dimension_semantics = [#tpu.dimension_semantics<parallel>], iteration_bounds = array<i64: 1>, scalar_prefetch = 0 : i64, scratch_operands = 0 : i64, tpu.core_type = #tpu.core_type<tc>, window_params = [{transform_indices = @transform_0, window_bounds = array<i64: 8, 16, 16>}, {transform_indices = @transform_1, window_bounds = array<i64: 8, 256>}]} {
    %c0 = arith.constant 0 : index
    %c0_0 = arith.constant 0 : index
    %c0_1 = arith.constant 0 : index
    %0 = vector.load %arg1[%c0, %c0_0, %c0_1] : memref<8x16x16xf32, #tpu.memory_space<vmem>>, vector<8x16x16xf32>
    %1 = tpu.transpose %0, [0, 2, 1] : vector<8x16x16xf32> -> vector<8x16x16xf32>
    %2 = vector.shape_cast %1 : vector<8x16x16xf32> to vector<8x256xf32>
    %c0_2 = arith.constant 0 : index
    %c0_3 = arith.constant 0 : index
    %3 = vector.load %arg2[%c0_2, %c0_3] : memref<8x256xf32, #tpu.memory_space<vmem>>, vector<8x256xf32>
    tpu.vector_store %arg2[%c0_2, %c0_3], %2 {strides = array<i32>} : memref<8x256xf32, #tpu.memory_space<vmem>>, vector<8x256xf32>,
    return
  }
  func.func @transform_0(%arg0: i32) -> (i32, i32, i32) {
    %c0_i32 = arith.constant 0 : i32
    %c0_i32_0 = arith.constant 0 : i32
    %c0_i32_1 = arith.constant 0 : i32
    return %arg0, %c0_i32, %c0_i32_0 : i32, i32, i32
  }
  func.func @transform_1(%arg0: i32) -> (i32, i32) {
    %c0_i32 = arith.constant 0 : i32
    %c0_i32_0 = arith.constant 0 : i32
    return %arg0, %c0_i32 : i32, i32
  }
}

</mosaic_0001>

<llo_original>
// kernel: tpu_custom_call.1
$region0: #{tpu_custom_call.1}
  #allocation0 [shape = 'u32[]', space=smem, size = 0x4, offset = 0x4, fixed_abs, tag = 'smem constant byte address 0x4 - core index']
  #allocation1 [shape = 'u32[144,128]{1,0:T(1,128)}', space=vmem, size = 0x12000, scoped, tag = 'internal scratch']
  %s0 = inlined_call_operand.hbm [shape: f32[8,16,16], index: 0, kind: input, shape index: {}]
  %s1 = inlined_call_operand.hbm [shape: f32[8,256], index: 1, kind: output, shape index: {}]
  %s2 = sld [smem:[#allocation0]]
  $region18: #{tpu_custom_call.1} parent=0
    _
  %s4 = ssub.s32 1, %s2
  %s5 = scalar_select 0, %s4, %s2
  $region1: #{tpu_custom_call.1} parent=0
    #allocation2 [shape = 'u8[65536]{0}', space=vmem, size = 0x10000, scoped, tag = 'input window, operand 0, single buffered']
    #allocation3 [shape = 's32[1]{0}', space=sflag, size = 0x4, scoped, tag = 'scoped memory for tpu_custom_call.1']
    #allocation4 [shape = 's32[1]{0}', space=sflag, size = 0x4, scoped, tag = 'scoped memory for tpu_custom_call.1']
    #allocation5 [shape = 'u8[8192]{0}', space=vmem, size = 0x2000, scoped, tag = 'output window, operand 0, single buffered']
    %6 = vsyncpa [#allocation3], 0
    %7 = vsyncpa [#allocation4], 0
    // Predicated region
    $region2: #{tpu_custom_call.1} parent=1 // pred_check
      _
    $region3: #{tpu_custom_call.1} parent=1 // pred_check_branch
      %9 = sbr.rel (0) target = $region5
    $region4: #{tpu_custom_call.1} parent=1 // pred_region
      %s11 = ssub.s32 2048, 2048
      %12 = vsyncadd [#allocation3], %s11
      %s13 = sshll.u32 [#allocation2], 4
      %s14 = int_to_ptr.vmem [resolvable:$true] %s13
      %19 = dma.hbm_to_vmem [thread:$0]  %s0, 2048, %s14, [#allocation3], 128, 128, 8
    $region5: #{tpu_custom_call.1} parent=1 // pred_fallthru
      _
    // Predicated region
    $region6: #{tpu_custom_call.1} parent=1 // pred_check
      _
    $region7: #{tpu_custom_call.1} parent=1 // pred_check_branch
      %21 = sbr.rel (0) target = $region9
    $region8: #{tpu_custom_call.1} parent=1 // pred_region
      %22 = dma.done [#allocation3], 2048
    $region9: #{tpu_custom_call.1} parent=1 // pred_fallthru
      _
    %v23 = vld [vmem:[#allocation2] sm:$0xff]
    %v24 = vld [vmem:[#allocation2 + $0x8] sm:$0xff]
    %v25 = vld [vmem:[#allocation2 + $0x10] sm:$0xff]
    %v26 = vld [vmem:[#allocation2 + $0x18] sm:$0xff]
    %v27 = vld [vmem:[#allocation2 + $0x20] sm:$0xff]
    %v28 = vld [vmem:[#allocation2 + $0x28] sm:$0xff]
    %v29 = vld [vmem:[#allocation2 + $0x30] sm:$0xff]
    %v30 = vld [vmem:[#allocation2 + $0x38] sm:$0xff]
    %v31 = vld [vmem:[#allocation2 + $0x40] sm:$0xff]
    %v32 = vld [vmem:[#allocation2 + $0x48] sm:$0xff]
    %v33 = vld [vmem:[#allocation2 + $0x50] sm:$0xff]
    %v34 = vld [vmem:[#allocation2 + $0x58] sm:$0xff]
    %v35 = vld [vmem:[#allocation2 + $0x60] sm:$0xff]
    %v36 = vld [vmem:[#allocation2 + $0x68] sm:$0xff]
    %v37 = vld [vmem:[#allocation2 + $0x70] sm:$0xff]
    %v38 = vld [vmem:[#allocation2 + $0x78] sm:$0xff]
    %39 = vxpose.xlu0.b32.start [1/16] %v23, 128
    %40 = vxpose.xlu0.b32.cont [2/16] %v24, 128
    %41 = vxpose.xlu0.b32.cont [3/16] 0.0, 128
    %42 = vxpose.xlu0.b32.cont [4/16] 0.0, 128
    %43 = vxpose.xlu0.b32.cont [5/16] 0.0, 128
    %44 = vxpose.xlu0.b32.cont [6/16] 0.0, 128
    %45 = vxpose.xlu0.b32.cont [7/16] 0.0, 128
    %46 = vxpose.xlu0.b32.cont [8/16] 0.0, 128
    %47 = vxpose.xlu0.b32.cont [9/16] 0.0, 128
    %48 = vxpose.xlu0.b32.cont [10/16] 0.0, 128
    %49 = vxpose.xlu0.b32.cont [11/16] 0.0, 128
    %50 = vxpose.xlu0.b32.cont [12/16] 0.0, 128
    %51 = vxpose.xlu0.b32.cont [13/16] 0.0, 128
    %52 = vxpose.xlu0.b32.cont [14/16] 0.0, 128
    %53 = vxpose.xlu0.b32.cont [15/16] 0.0, 128
    %54 = vxpose.xlu0.b32.end [16/16] 0.0, 128
    %v55 = vpop.trf.xlu0
    %v56 = vpop.trf.xlu0
    %v57 = vpop.trf.xlu0
    %v58 = vpop.trf.xlu0
    %v59 = vpop.trf.xlu0
    %v60 = vpop.trf.xlu0
    %v61 = vpop.trf.xlu0
    %v62 = vpop.trf.xlu0
    %v63 = vpop.trf.xlu0
    %v64 = vpop.trf.xlu0
    %v65 = vpop.trf.xlu0
    %v66 = vpop.trf.xlu0
    %v67 = vpop.trf.xlu0
    %v68 = vpop.trf.xlu0
    %v69 = vpop.trf.xlu0
    %v70 = vpop.trf.xlu0
    %71 = vxpose.xlu0.b32.start [1/16] %v25, 128
    %72 = vxpose.xlu0.b32.cont [2/16] %v26, 128
    %73 = vxpose.xlu0.b32.cont [3/16] 0.0, 128
    %74 = vxpose.xlu0.b32.cont [4/16] 0.0, 128
    %75 = vxpose.xlu0.b32.cont [5/16] 0.0, 128
    %76 = vxpose.xlu0.b32.cont [6/16] 0.0, 128
    %77 = vxpose.xlu0.b32.cont [7/16] 0.0, 128
    %78 = vxpose.xlu0.b32.cont [8/16] 0.0, 128
    %79 = vxpose.xlu0.b32.cont [9/16] 0.0, 128
    %80 = vxpose.xlu0.b32.cont [10/16] 0.0, 128
    %81 = vxpose.xlu0.b32.cont [11/16] 0.0, 128
    %82 = vxpose.xlu0.b32.cont [12/16] 0.0, 128
    %83 = vxpose.xlu0.b32.cont [13/16] 0.0, 128
    %84 = vxpose.xlu0.b32.cont [14/16] 0.0, 128
    %85 = vxpose.xlu0.b32.cont [15/16] 0.0, 128
    %86 = vxpose.xlu0.b32.end [16/16] 0.0, 128
    %v87 = vpop.trf.xlu0
    %v88 = vpop.trf.xlu0
    %v89 = vpop.trf.xlu0
    %v90 = vpop.trf.xlu0
    %v91 = vpop.trf.xlu0
    %v92 = vpop.trf.xlu0
    %v93 = vpop.trf.xlu0
    %v94 = vpop.trf.xlu0
    %v95 = vpop.trf.xlu0
    %v96 = vpop.trf.xlu0
    %v97 = vpop.trf.xlu0
    %v98 = vpop.trf.xlu0
    %v99 = vpop.trf.xlu0
    %v100 = vpop.trf.xlu0
    %v101 = vpop.trf.xlu0
    %v102 = vpop.trf.xlu0
    %103 = vxpose.xlu0.b32.start [1/16] %v27, 128
    %104 = vxpose.xlu0.b32.cont [2/16] %v28, 128
    %105 = vxpose.xlu0.b32.cont [3/16] 0.0, 128
    %106 = vxpose.xlu0.b32.cont [4/16] 0.0, 128
    %107 = vxpose.xlu0.b32.cont [5/16] 0.0, 128
    %108 = vxpose.xlu0.b32.cont [6/16] 0.0, 128
    %109 = vxpose.xlu0.b32.cont [7/16] 0.0, 128
    %110 = vxpose.xlu0.b32.cont [8/16] 0.0, 128
    %111 = vxpose.xlu0.b32.cont [9/16] 0.0, 128
    %112 = vxpose.xlu0.b32.cont [10/16] 0.0, 128
    %113 = vxpose.xlu0.b32.cont [11/16] 0.0, 128
    %114 = vxpose.xlu0.b32.cont [12/16] 0.0, 128
    %115 = vxpose.xlu0.b32.cont [13/16] 0.0, 128
    %116 = vxpose.xlu0.b32.cont [14/16] 0.0, 128
    %117 = vxpose.xlu0.b32.cont [15/16] 0.0, 128
    %118 = vxpose.xlu0.b32.end [16/16] 0.0, 128
    %v119 = vpop.trf.xlu0
    %v120 = vpop.trf.xlu0
    %v121 = vpop.trf.xlu0
    %v122 = vpop.trf.xlu0
    %v123 = vpop.trf.xlu0
    %v124 = vpop.trf.xlu0
    %v125 = vpop.trf.xlu0
    %v126 = vpop.trf.xlu0
    %v127 = vpop.trf.xlu0
    %v128 = vpop.trf.xlu0
    %v129 = vpop.trf.xlu0
    %v130 = vpop.trf.xlu0
    %v131 = vpop.trf.xlu0
    %v132 = vpop.trf.xlu0
    %v133 = vpop.trf.xlu0
    %v134 = vpop.trf.xlu0
    %135 = vxpose.xlu0.b32.start [1/16] %v29, 128
    %136 = vxpose.xlu0.b32.cont [2/16] %v30, 128
    %137 = vxpose.xlu0.b32.cont [3/16] 0.0, 128
    %138 = vxpose.xlu0.b32.cont [4/16] 0.0, 128
    %139 = vxpose.xlu0.b32.cont [5/16] 0.0, 128
    %140 = vxpose.xlu0.b32.cont [6/16] 0.0, 128
    %141 = vxpose.xlu0.b32.cont [7/16] 0.0, 128
    %142 = vxpose.xlu0.b32.cont [8/16] 0.0, 128
    %143 = vxpose.xlu0.b32.cont [9/16] 0.0, 128
    %144 = vxpose.xlu0.b32.cont [10/16] 0.0, 128
    %145 = vxpose.xlu0.b32.cont [11/16] 0.0, 128
    %146 = vxpose.xlu0.b32.cont [12/16] 0.0, 128
    %147 = vxpose.xlu0.b32.cont [13/16] 0.0, 128
    %148 = vxpose.xlu0.b32.cont [14/16] 0.0, 128
    %149 = vxpose.xlu0.b32.cont [15/16] 0.0, 128
    %150 = vxpose.xlu0.b32.end [16/16] 0.0, 128
    %v151 = vpop.trf.xlu0
    %v152 = vpop.trf.xlu0
    %v153 = vpop.trf.xlu0
    %v154 = vpop.trf.xlu0
    %v155 = vpop.trf.xlu0
    %v156 = vpop.trf.xlu0
    %v157 = vpop.trf.xlu0
    %v158 = vpop.trf.xlu0
    %v159 = vpop.trf.xlu0
    %v160 = vpop.trf.xlu0
    %v161 = vpop.trf.xlu0
    %v162 = vpop.trf.xlu0
    %v163 = vpop.trf.xlu0
    %v164 = vpop.trf.xlu0
    %v165 = vpop.trf.xlu0
    %v166 = vpop.trf.xlu0
    %167 = vxpose.xlu0.b32.start [1/16] %v31, 128
    %168 = vxpose.xlu0.b32.cont [2/16] %v32, 128
    %169 = vxpose.xlu0.b32.cont [3/16] 0.0, 128
    %170 = vxpose.xlu0.b32.cont [4/16] 0.0, 128
    %171 = vxpose.xlu0.b32.cont [5/16] 0.0, 128
    %172 = vxpose.xlu0.b32.cont [6/16] 0.0, 128
    %173 = vxpose.xlu0.b32.cont [7/16] 0.0, 128
    %174 = vxpose.xlu0.b32.cont [8/16] 0.0, 128
    %175 = vxpose.xlu0.b32.cont [9/16] 0.0, 128
    %176 = vxpose.xlu0.b32.cont [10/16] 0.0, 128
    %177 = vxpose.xlu0.b32.cont [11/16] 0.0, 128
    %178 = vxpose.xlu0.b32.cont [12/16] 0.0, 128
    %179 = vxpose.xlu0.b32.cont [13/16] 0.0, 128
    %180 = vxpose.xlu0.b32.cont [14/16] 0.0, 128
    %181 = vxpose.xlu0.b32.cont [15/16] 0.0, 128
    %182 = vxpose.xlu0.b32.end [16/16] 0.0, 128
    %v183 = vpop.trf.xlu0
    %v184 = vpop.trf.xlu0
    %v185 = vpop.trf.xlu0
    %v186 = vpop.trf.xlu0
    %v187 = vpop.trf.xlu0
    %v188 = vpop.trf.xlu0
    %v189 = vpop.trf.xlu0
    %v190 = vpop.trf.xlu0
    %v191 = vpop.trf.xlu0
    %v192 = vpop.trf.xlu0
    %v193 = vpop.trf.xlu0
    %v194 = vpop.trf.xlu0
    %v195 = vpop.trf.xlu0
    %v196 = vpop.trf.xlu0
    %v197 = vpop.trf.xlu0
    %v198 = vpop.trf.xlu0
    %199 = vxpose.xlu0.b32.start [1/16] %v33, 128
    %200 = vxpose.xlu0.b32.cont [2/16] %v34, 128
    %201 = vxpose.xlu0.b32.cont [3/16] 0.0, 128
    %202 = vxpose.xlu0.b32.cont [4/16] 0.0, 128
    %203 = vxpose.xlu0.b32.cont [5/16] 0.0, 128
    %204 = vxpose.xlu0.b32.cont [6/16] 0.0, 128
    %205 = vxpose.xlu0.b32.cont [7/16] 0.0, 128
    %206 = vxpose.xlu0.b32.cont [8/16] 0.0, 128
    %207 = vxpose.xlu0.b32.cont [9/16] 0.0, 128
    %208 = vxpose.xlu0.b32.cont [10/16] 0.0, 128
    %209 = vxpose.xlu0.b32.cont [11/16] 0.0, 128
    %210 = vxpose.xlu0.b32.cont [12/16] 0.0, 128
    %211 = vxpose.xlu0.b32.cont [13/16] 0.0, 128
    %212 = vxpose.xlu0.b32.cont [14/16] 0.0, 128
    %213 = vxpose.xlu0.b32.cont [15/16] 0.0, 128
    %214 = vxpose.xlu0.b32.end [16/16] 0.0, 128
    %v215 = vpop.trf.xlu0
    %v216 = vpop.trf.xlu0
    %v217 = vpop.trf.xlu0
    %v218 = vpop.trf.xlu0
    %v219 = vpop.trf.xlu0
    %v220 = vpop.trf.xlu0
    %v221 = vpop.trf.xlu0
    %v222 = vpop.trf.xlu0
    %v223 = vpop.trf.xlu0
    %v224 = vpop.trf.xlu0
    %v225 = vpop.trf.xlu0
    %v226 = vpop.trf.xlu0
    %v227 = vpop.trf.xlu0
    %v228 = vpop.trf.xlu0
    %v229 = vpop.trf.xlu0
    %v230 = vpop.trf.xlu0
    %231 = vxpose.xlu0.b32.start [1/16] %v35, 128
    %232 = vxpose.xlu0.b32.cont [2/16] %v36, 128
    %233 = vxpose.xlu0.b32.cont [3/16] 0.0, 128
    %234 = vxpose.xlu0.b32.cont [4/16] 0.0, 128
    %235 = vxpose.xlu0.b32.cont [5/16] 0.0, 128
    %236 = vxpose.xlu0.b32.cont [6/16] 0.0, 128
    %237 = vxpose.xlu0.b32.cont [7/16] 0.0, 128
    %238 = vxpose.xlu0.b32.cont [8/16] 0.0, 128
    %239 = vxpose.xlu0.b32.cont [9/16] 0.0, 128
    %240 = vxpose.xlu0.b32.cont [10/16] 0.0, 128
    %241 = vxpose.xlu0.b32.cont [11/16] 0.0, 128
    %242 = vxpose.xlu0.b32.cont [12/16] 0.0, 128
    %243 = vxpose.xlu0.b32.cont [13/16] 0.0, 128
    %244 = vxpose.xlu0.b32.cont [14/16] 0.0, 128
    %245 = vxpose.xlu0.b32.cont [15/16] 0.0, 128
    %246 = vxpose.xlu0.b32.end [16/16] 0.0, 128
    %v247 = vpop.trf.xlu0
    %v248 = vpop.trf.xlu0
    %v249 = vpop.trf.xlu0
    %v250 = vpop.trf.xlu0
    %v251 = vpop.trf.xlu0
    %v252 = vpop.trf.xlu0
    %v253 = vpop.trf.xlu0
    %v254 = vpop.trf.xlu0
    %v255 = vpop.trf.xlu0
    %v256 = vpop.trf.xlu0
    %v257 = vpop.trf.xlu0
    %v258 = vpop.trf.xlu0
    %v259 = vpop.trf.xlu0
    %v260 = vpop.trf.xlu0
    %v261 = vpop.trf.xlu0
    %v262 = vpop.trf.xlu0
    %263 = vxpose.xlu0.b32.start [1/16] %v37, 128
    %264 = vxpose.xlu0.b32.cont [2/16] %v38, 128
    %265 = vxpose.xlu0.b32.cont [3/16] 0.0, 128
    %266 = vxpose.xlu0.b32.cont [4/16] 0.0, 128
    %267 = vxpose.xlu0.b32.cont [5/16] 0.0, 128
    %268 = vxpose.xlu0.b32.cont [6/16] 0.0, 128
    %269 = vxpose.xlu0.b32.cont [7/16] 0.0, 128
    %270 = vxpose.xlu0.b32.cont [8/16] 0.0, 128
    %271 = vxpose.xlu0.b32.cont [9/16] 0.0, 128
    %272 = vxpose.xlu0.b32.cont [10/16] 0.0, 128
    %273 = vxpose.xlu0.b32.cont [11/16] 0.0, 128
    %274 = vxpose.xlu0.b32.cont [12/16] 0.0, 128
    %275 = vxpose.xlu0.b32.cont [13/16] 0.0, 128
    %276 = vxpose.xlu0.b32.cont [14/16] 0.0, 128
    %277 = vxpose.xlu0.b32.cont [15/16] 0.0, 128
    %278 = vxpose.xlu0.b32.end [16/16] 0.0, 128
    %v279 = vpop.trf.xlu0
    %v280 = vpop.trf.xlu0
    %v281 = vpop.trf.xlu0
    %v282 = vpop.trf.xlu0
    %v283 = vpop.trf.xlu0
    %v284 = vpop.trf.xlu0
    %v285 = vpop.trf.xlu0
    %v286 = vpop.trf.xlu0
    %v287 = vpop.trf.xlu0
    %v288 = vpop.trf.xlu0
    %v289 = vpop.trf.xlu0
    %v290 = vpop.trf.xlu0
    %v291 = vpop.trf.xlu0
    %v292 = vpop.trf.xlu0
    %v293 = vpop.trf.xlu0
    %v294 = vpop.trf.xlu0
    %v295 = vcombine.low %v55, %v119
    %v296 = vcombine.high %v55, %v119
    %v298 = vunpack.c.l.s4 1983009808
    %v299 = vunpack.c.0.s8 %v298
    %v300 = vlaneseq
    %v301 = vshrl.u32 %v300, 7
    %v302 = vsub.s32 %v299, %v301
    %v303 = vrot.slane %v295, %v302
    %v305 = vunpack.c.l.s4 1983009808
    %v306 = vunpack.c.0.s8 %v305
    %v307 = vlaneseq
    %v308 = vshrl.u32 %v307, 7
    %v309 = vsub.s32 %v306, %v308
    %v310 = vrot.slane %v296, %v309
    %v311 = vcombine.low %v87, %v151
    %v312 = vcombine.high %v87, %v151
    %v314 = vunpack.c.l.s4 1983009808
    %v315 = vunpack.c.0.s8 %v314
    %v316 = vlaneseq
    %v317 = vshrl.u32 %v316, 7
    %v318 = vsub.s32 %v315, %v317
    %v319 = vrot.slane %v311, %v318
    %v321 = vunpack.c.l.s4 1983009808
    %v322 = vunpack.c.0.s8 %v321
    %v323 = vlaneseq
    %v324 = vshrl.u32 %v323, 7
    %v325 = vsub.s32 %v322, %v324
    %v326 = vrot.slane %v312, %v325
    %v327 = vcombine.low %v183, %v247
    %v328 = vcombine.high %v183, %v247
    %v330 = vunpack.c.l.s4 1983009808
    %v331 = vunpack.c.0.s8 %v330
    %v332 = vlaneseq
    %v333 = vshrl.u32 %v332, 7
    %v334 = vsub.s32 %v331, %v333
    %v335 = vrot.slane %v327, %v334
    %v337 = vunpack.c.l.s4 1983009808
    %v338 = vunpack.c.0.s8 %v337
    %v339 = vlaneseq
    %v340 = vshrl.u32 %v339, 7
    %v341 = vsub.s32 %v338, %v340
    %v342 = vrot.slane %v328, %v341
    %v343 = vcombine.low %v215, %v279
    %v344 = vcombine.high %v215, %v279
    %v346 = vunpack.c.l.s4 1983009808
    %v347 = vunpack.c.0.s8 %v346
    %v348 = vlaneseq
    %v349 = vshrl.u32 %v348, 7
    %v350 = vsub.s32 %v347, %v349
    %v351 = vrot.slane %v343, %v350
    %v353 = vunpack.c.l.s4 1983009808
    %v354 = vunpack.c.0.s8 %v353
    %v355 = vlaneseq
    %v356 = vshrl.u32 %v355, 7
    %v357 = vsub.s32 %v354, %v356
    %v358 = vrot.slane %v344, %v357
    %v359 = vcombine.low %v303, %v319
    %v360 = vcombine.high %v303, %v319
    %v362 = vunpack.c.l.s4 1934713408
    %v363 = vunpack.c.0.s8 %v362
    %v364 = vlaneseq
    %v365 = vshrl.u32 %v364, 7
    %v366 = vsub.s32 %v363, %v365
    %v367 = vrot.slane %v359, %v366
    %v369 = vunpack.c.l.s4 1934713408
    %v370 = vunpack.c.0.s8 %v369
    %v371 = vlaneseq
    %v372 = vshrl.u32 %v371, 7
    %v373 = vsub.s32 %v370, %v372
    %v374 = vrot.slane %v360, %v373
    %v375 = vcombine.low %v310, %v326
    %v376 = vcombine.high %v310, %v326
    %v378 = vunpack.c.l.s4 1934713408
    %v379 = vunpack.c.0.s8 %v378
    %v380 = vlaneseq
    %v381 = vshrl.u32 %v380, 7
    %v382 = vsub.s32 %v379, %v381
    %v383 = vrot.slane %v375, %v382
    %v385 = vunpack.c.l.s4 1934713408
    %v386 = vunpack.c.0.s8 %v385
    %v387 = vlaneseq
    %v388 = vshrl.u32 %v387, 7
    %v389 = vsub.s32 %v386, %v388
    %v390 = vrot.slane %v376, %v389
    %v391 = vcombine.low %v335, %v351
    %v392 = vcombine.high %v335, %v351
    %v394 = vunpack.c.l.s4 1934713408
    %v395 = vunpack.c.0.s8 %v394
    %v396 = vlaneseq
    %v397 = vshrl.u32 %v396, 7
    %v398 = vsub.s32 %v395, %v397
    %v399 = vrot.slane %v391, %v398
    %v401 = vunpack.c.l.s4 1934713408
    %v402 = vunpack.c.0.s8 %v401
    %v403 = vlaneseq
    %v404 = vshrl.u32 %v403, 7
    %v405 = vsub.s32 %v402, %v404
    %v406 = vrot.slane %v392, %v405
    %v407 = vcombine.low %v342, %v358
    %v408 = vcombine.high %v342, %v358
    %v410 = vunpack.c.l.s4 1934713408
    %v411 = vunpack.c.0.s8 %v410
    %v412 = vlaneseq
    %v413 = vshrl.u32 %v412, 7
    %v414 = vsub.s32 %v411, %v413
    %v415 = vrot.slane %v407, %v414
    %v417 = vunpack.c.l.s4 1934713408
    %v418 = vunpack.c.0.s8 %v417
    %v419 = vlaneseq
    %v420 = vshrl.u32 %v419, 7
    %v421 = vsub.s32 %v418, %v420
    %v422 = vrot.slane %v408, %v421
    %v423 = vcombine.low %v367, %v399
    %v424 = vcombine.high %v367, %v399
    %v425 = vcombine.low %v374, %v406
    %v426 = vcombine.high %v374, %v406
    %v427 = vcombine.low %v383, %v415
    %v428 = vcombine.high %v383, %v415
    %v429 = vcombine.low %v390, %v422
    %v430 = vcombine.high %v390, %v422
    %v431 = vcombine.low %v56, %v120
    %v432 = vcombine.high %v56, %v120
    %v434 = vunpack.c.l.s4 1983009808
    %v435 = vunpack.c.0.s8 %v434
    %v436 = vlaneseq
    %v437 = vshrl.u32 %v436, 7
    %v438 = vsub.s32 %v435, %v437
    %v439 = vrot.slane %v431, %v438
    %v441 = vunpack.c.l.s4 1983009808
    %v442 = vunpack.c.0.s8 %v441
    %v443 = vlaneseq
    %v444 = vshrl.u32 %v443, 7
    %v445 = vsub.s32 %v442, %v444
    %v446 = vrot.slane %v432, %v445
    %v447 = vcombine.low %v88, %v152
    %v448 = vcombine.high %v88, %v152
    %v450 = vunpack.c.l.s4 1983009808
    %v451 = vunpack.c.0.s8 %v450
    %v452 = vlaneseq
    %v453 = vshrl.u32 %v452, 7
    %v454 = vsub.s32 %v451, %v453
    %v455 = vrot.slane %v447, %v454
    %v457 = vunpack.c.l.s4 1983009808
    %v458 = vunpack.c.0.s8 %v457
    %v459 = vlaneseq
    %v460 = vshrl.u32 %v459, 7
    %v461 = vsub.s32 %v458, %v460
    %v462 = vrot.slane %v448, %v461
    %v463 = vcombine.low %v184, %v248
    %v464 = vcombine.high %v184, %v248
    %v466 = vunpack.c.l.s4 1983009808
    %v467 = vunpack.c.0.s8 %v466
    %v468 = vlaneseq
    %v469 = vshrl.u32 %v468, 7
    %v470 = vsub.s32 %v467, %v469
    %v471 = vrot.slane %v463, %v470
    %v473 = vunpack.c.l.s4 1983009808
    %v474 = vunpack.c.0.s8 %v473
    %v475 = vlaneseq
    %v476 = vshrl.u32 %v475, 7
    %v477 = vsub.s32 %v474, %v476
    %v478 = vrot.slane %v464, %v477
    %v479 = vcombine.low %v216, %v280
    %v480 = vcombine.high %v216, %v280
    %v482 = vunpack.c.l.s4 1983009808
    %v483 = vunpack.c.0.s8 %v482
    %v484 = vlaneseq
    %v485 = vshrl.u32 %v484, 7
    %v486 = vsub.s32 %v483, %v485
    %v487 = vrot.slane %v479, %v486
    %v489 = vunpack.c.l.s4 1983009808
    %v490 = vunpack.c.0.s8 %v489
    %v491 = vlaneseq
    %v492 = vshrl.u32 %v491, 7
    %v493 = vsub.s32 %v490, %v492
    %v494 = vrot.slane %v480, %v493
    %v495 = vcombine.low %v439, %v455
    %v496 = vcombine.high %v439, %v455
    %v498 = vunpack.c.l.s4 1934713408
    %v499 = vunpack.c.0.s8 %v498
    %v500 = vlaneseq
    %v501 = vshrl.u32 %v500, 7
    %v502 = vsub.s32 %v499, %v501
    %v503 = vrot.slane %v495, %v502
    %v505 = vunpack.c.l.s4 1934713408
    %v506 = vunpack.c.0.s8 %v505
    %v507 = vlaneseq
    %v508 = vshrl.u32 %v507, 7
    %v509 = vsub.s32 %v506, %v508
    %v510 = vrot.slane %v496, %v509
    %v511 = vcombine.low %v446, %v462
    %v512 = vcombine.high %v446, %v462
    %v514 = vunpack.c.l.s4 1934713408
    %v515 = vunpack.c.0.s8 %v514
    %v516 = vlaneseq
    %v517 = vshrl.u32 %v516, 7
    %v518 = vsub.s32 %v515, %v517
    %v519 = vrot.slane %v511, %v518
    %v521 = vunpack.c.l.s4 1934713408
    %v522 = vunpack.c.0.s8 %v521
    %v523 = vlaneseq
    %v524 = vshrl.u32 %v523, 7
    %v525 = vsub.s32 %v522, %v524
    %v526 = vrot.slane %v512, %v525
    %v527 = vcombine.low %v471, %v487
    %v528 = vcombine.high %v471, %v487
    %v530 = vunpack.c.l.s4 1934713408
    %v531 = vunpack.c.0.s8 %v530
    %v532 = vlaneseq
    %v533 = vshrl.u32 %v532, 7
    %v534 = vsub.s32 %v531, %v533
    %v535 = vrot.slane %v527, %v534
    %v537 = vunpack.c.l.s4 1934713408
    %v538 = vunpack.c.0.s8 %v537
    %v539 = vlaneseq
    %v540 = vshrl.u32 %v539, 7
    %v541 = vsub.s32 %v538, %v540
    %v542 = vrot.slane %v528, %v541
    %v543 = vcombine.low %v478, %v494
    %v544 = vcombine.high %v478, %v494
    %v546 = vunpack.c.l.s4 1934713408
    %v547 = vunpack.c.0.s8 %v546
    %v548 = vlaneseq
    %v549 = vshrl.u32 %v548, 7
    %v550 = vsub.s32 %v547, %v549
    %v551 = vrot.slane %v543, %v550
    %v553 = vunpack.c.l.s4 1934713408
    %v554 = vunpack.c.0.s8 %v553
    %v555 = vlaneseq
    %v556 = vshrl.u32 %v555, 7
    %v557 = vsub.s32 %v554, %v556
    %v558 = vrot.slane %v544, %v557
    %v559 = vcombine.low %v503, %v535
    %v560 = vcombine.high %v503, %v535
    %v561 = vcombine.low %v510, %v542
    %v562 = vcombine.high %v510, %v542
    %v563 = vcombine.low %v519, %v551
    %v564 = vcombine.high %v519, %v551
    %v565 = vcombine.low %v526, %v558
    %v566 = vcombine.high %v526, %v558
    %568 = vrot.lane.b32.xlu0 %v424, 16
    %v569 = vpop.permute.xlu0 %568
    %572 = vrot.lane.b32.xlu0 %v425, 32
    %v573 = vpop.permute.xlu0 %572
    %576 = vrot.lane.b32.xlu0 %v426, 48
    %v577 = vpop.permute.xlu0 %576
    %580 = vrot.lane.b32.xlu0 %v427, 64
    %v581 = vpop.permute.xlu0 %580
    %584 = vrot.lane.b32.xlu0 %v428, 80
    %v585 = vpop.permute.xlu0 %584
    %588 = vrot.lane.b32.xlu0 %v429, 96
    %v589 = vpop.permute.xlu0 %588
    %592 = vrot.lane.b32.xlu0 %v430, 112
    %v593 = vpop.permute.xlu0 %592
    %596 = vrot.lane.b32.xlu0 %v560, 16
    %v597 = vpop.permute.xlu0 %596
    %600 = vrot.lane.b32.xlu0 %v561, 32
    %v601 = vpop.permute.xlu0 %600
    %604 = vrot.lane.b32.xlu0 %v562, 48
    %v605 = vpop.permute.xlu0 %604
    %608 = vrot.lane.b32.xlu0 %v563, 64
    %v609 = vpop.permute.xlu0 %608
    %612 = vrot.lane.b32.xlu0 %v564, 80
    %v613 = vpop.permute.xlu0 %612
    %616 = vrot.lane.b32.xlu0 %v565, 96
    %v617 = vpop.permute.xlu0 %616
    %620 = vrot.lane.b32.xlu0 %v566, 112
    %v621 = vpop.permute.xlu0 %620
    %vm623 = vcmask 130048
    %v624 = vsel %vm623, %v423, %v569
    %vm625 = vcmask 261120
    %v626 = vsel %vm625, %v624, %v573
    %vm627 = vcmask 392192
    %v628 = vsel %vm627, %v626, %v577
    %vm629 = vcmask 523264
    %v630 = vsel %vm629, %v628, %v581
    %vm631 = vcmask 654336
    %v632 = vsel %vm631, %v630, %v585
    %vm633 = vcmask 785408
    %v634 = vsel %vm633, %v632, %v589
    %vm635 = vcmask 916480
    %v636 = vsel %vm635, %v634, %v593
    %v637 = vsel %vm623, %v559, %v597
    %v638 = vsel %vm625, %v637, %v601
    %v639 = vsel %vm627, %v638, %v605
    %v640 = vsel %vm629, %v639, %v609
    %v641 = vsel %vm631, %v640, %v613
    %v642 = vsel %vm633, %v641, %v617
    %v643 = vsel %vm635, %v642, %v621
    %644 = vst [vmem:[#allocation5] sm:$0xff] %v636
    %645 = vst [vmem:[#allocation5 + $0x8] sm:$0xff] %v643
    // Predicated region
    $region10: #{tpu_custom_call.1} parent=1 // pred_check
      _
    $region11: #{tpu_custom_call.1} parent=1 // pred_check_branch
      %647 = sbr.rel (0) target = $region13
    $region12: #{tpu_custom_call.1} parent=1 // pred_region
      %s649 = ssub.s32 256, 256
      %650 = vsyncadd [#allocation4], %s649
      %s652 = sshll.u32 [#allocation5], 4
      %s653 = int_to_ptr.vmem [resolvable:$true] %s652
      %655 = dma.vmem_to_hbm [thread:$0]  %s653, 256, %s1, [#allocation4]
    $region13: #{tpu_custom_call.1} parent=1 // pred_fallthru
      _
    // Predicated region
    $region14: #{tpu_custom_call.1} parent=1 // pred_check
      _
    $region15: #{tpu_custom_call.1} parent=1 // pred_check_branch
      %657 = sbr.rel (0) target = $region17
    $region16: #{tpu_custom_call.1} parent=1 // pred_region
      %658 = dma.done [#allocation4], 256
    $region17: #{tpu_custom_call.1} parent=1 // pred_fallthru
      _
    %659 = vsyncpa [#allocation3], 1
    %660 = vsyncpa [#allocation4], 1

</llo_original>
